<compile_context>
chip_gen: v6e
topology: v6e:2x2x1
jax: 0.10.0
libtpu: 0.0.40
codegen_flags: <defaults>
</compile_context>

<pallas_src>
import math
import functools

import jax
import jax.numpy as jnp
from jax.experimental import pallas as pl
from jax.experimental.pallas import tpu as pltpu


# ----------------------------------------------------------------------------- #
# Parameter (buffer) construction — mirrors the PyTorch __init__.
# ----------------------------------------------------------------------------- #
def make_pe_table(d_model: int, max_len: int = 5000) -> jnp.ndarray:
    """Returns pe of shape [max_len, d_model] (PyTorch buffer is [max_len, 1, d_model];
    we keep it squeezed and broadcast across batch in the wrapper)."""
    position = jnp.arange(0, max_len, dtype=jnp.float32)[:, None]          # [max_len, 1]
    div_term = jnp.exp(
        jnp.arange(0, d_model, 2, dtype=jnp.float32) * (-math.log(10000.0) / d_model)
    )
    pe = jnp.zeros((max_len, d_model), dtype=jnp.float32)
    pe = pe.at[:, 0::2].set(jnp.sin(position * div_term))
    pe = pe.at[:, 1::2].set(jnp.cos(position * div_term))
    return pe


# ----------------------------------------------------------------------------- #
# Pallas kernels
# ----------------------------------------------------------------------------- #
def _pe_add_kernel(x_ref, pe_ref, o_ref):
    # All refs: [TS, B*D] — lane-dense, no broadcast needed.
    o_ref[...] = x_ref[...] + pe_ref[...]


def _mix_u32(x):
    # lowbias32-style integer mixer: pure VPU int32 ops (xor / shift / mul).
    # No pltpu PRNG primitives, so it lowers on TPU *and* in interpret mode.
    x = x ^ (x >> jnp.uint32(16))
    x = x * jnp.uint32(0x7FEB352D)
    x = x ^ (x >> jnp.uint32(15))
    x = x * jnp.uint32(0x846CA68B)
    x = x ^ (x >> jnp.uint32(16))
    return x


def _pe_add_dropout_kernel(seed_ref, x_ref, pe_ref, o_ref, *, p: float):
    # Training path: add + inverted dropout with keep-prob (1 - p).
    ts, bd = x_ref.shape
    y = x_ref[...] + pe_ref[...]

    # Per-element counter that is unique across the whole (tiled) array, so the mask
    # does not repeat across grid tiles.
    row = jax.lax.broadcasted_iota(jnp.int32, (ts, bd), 0)
    col = jax.lax.broadcasted_iota(jnp.int32, (ts, bd), 1)
    grow = row + pl.program_id(0) * ts
    idx = (grow * bd + col).astype(jnp.uint32)

    seed = seed_ref[0].astype(jnp.uint32) * jnp.uint32(0x9E3779B9)
    bits = _mix_u32(idx ^ seed)

    # Integer-threshold compare (no float-uniform construction, no signed-shift hazard).
    threshold = jnp.uint32(min(int(round(p * 2.0 ** 32)), 0xFFFFFFFF))
    keep = bits >= threshold
    scale = jnp.float32(1.0 / (1.0 - p))
    o_ref[...] = jnp.where(keep, y * scale, jnp.zeros_like(y))


# ----------------------------------------------------------------------------- #
# Wrapper
# ----------------------------------------------------------------------------- #
# Conservative resident-VMEM budget: 3 arrays (x, pe, out) x 2 pipeline buffers each.
# Fits comfortably under scoped VMEM on v5e (16 MiB default raised below) / v6e / v7x.
_VMEM_BUDGET_BYTES = 24 * 1024 * 1024


def _choose_tile_rows(S: int, row_bytes: int) -> int:
    max_rows = _VMEM_BUDGET_BYTES // (6 * max(row_bytes, 1))
    if S <= max_rows:
        return S                       # single full-extent block (still legal layout)
    return max(8, (max_rows // 8) * 8)  # sublane-aligned tile


def positional_encoding(x: jnp.ndarray,
                        pe: jnp.ndarray,
                        *,
                        dropout_p: float = 0.1,
                        training: bool = False,
                        seed: int = 0) -> jnp.ndarray:
    """x: [S, B, D] float32.  pe: [max_len, D] float32.  Returns [S, B, D]."""
    S, B, D = x.shape
    BD = B * D
    pe_slice = pe[:S, :]                       # mirrors self.pe[:x.size(0), :]

    # Lane-dense 2-D presentation (free reshape for x; pe tiled across batch so the
    # in-kernel broadcast disappears).
    x2 = x.reshape(S, BD)
    pe2 = jnp.tile(pe_slice, (1, B))           # [S, B*D]

    row_bytes = BD * jnp.dtype(x.dtype).itemsize
    ts = _choose_tile_rows(S, row_bytes)
    grid = (pl.cdiv(S, ts),)

    compiler_params = pltpu.CompilerParams(
        dimension_semantics=("parallel",),     # lets v7x shard tiles across both TCs
        vmem_limit_bytes=32 * 1024 * 1024,
    )
    cost = pl.CostEstimate(
        flops=S * BD,
        transcendentals=0,
        bytes_accessed=3 * S * row_bytes,      # x read + pe read + out write
    )
    # TODO(synk): if the caller donates x, add input_output_aliases to reuse its HBM buffer.

    if not training or dropout_p == 0.0:
        # Eval mode: nn.Dropout is the identity.
        out2 = pl.pallas_call(
            _pe_add_kernel,
            out_shape=jax.ShapeDtypeStruct((S, BD), x.dtype),
            grid_spec=pltpu.PrefetchScalarGridSpec(
                num_scalar_prefetch=0,
                grid=grid,
                in_specs=[
                    pl.BlockSpec((ts, BD), lambda i: (i, 0)),
                    pl.BlockSpec((ts, BD), lambda i: (i, 0)),
                ],
                out_specs=pl.BlockSpec((ts, BD), lambda i: (i, 0)),
            ),
            compiler_params=compiler_params,
            cost_estimate=cost,
        )(x2, pe2)
        return out2.reshape(S, B, D)

    # Training mode: add + inverted dropout; seed lands in SMEM via scalar prefetch so
    # the caller can thread a fresh per-step seed without recompiling.
    seed_arr = jnp.asarray([seed], dtype=jnp.int32)
    kernel = functools.partial(_pe_add_dropout_kernel, p=float(dropout_p))
    out2 = pl.pallas_call(
        kernel,
        out_shape=jax.ShapeDtypeStruct((S, BD), x.dtype),
        grid_spec=pltpu.PrefetchScalarGridSpec(
            num_scalar_prefetch=1,
            grid=grid,
            in_specs=[
                pl.BlockSpec((ts, BD), lambda i, seed_ref: (i, 0)),
                pl.BlockSpec((ts, BD), lambda i, seed_ref: (i, 0)),
            ],
            out_specs=pl.BlockSpec((ts, BD), lambda i, seed_ref: (i, 0)),
        ),
        compiler_params=compiler_params,
        cost_estimate=cost,
    )(seed_arr, x2, pe2)
    return out2.reshape(S, B, D)


# ----------------------------------------------------------------------------- #
# Main
# ----------------------------------------------------------------------------- #
if __name__ == "__main__":
    key = jax.random.PRNGKey(0)

    seq_len, batch, d_model = 8, 2, 32
    max_len = 64  # small max_len for the example (module default is 5000)

    x = jax.random.normal(key, (seq_len, batch, d_model), dtype=jnp.float32)
    pe = make_pe_table(d_model, max_len)

    # Eval-mode forward (dropout == identity): deterministic reference check.
    out = positional_encoding(x, pe, dropout_p=0.1, training=False)
    out = jax.block_until_ready(out)
    ref = x + pe[:seq_len][:, None, :]
    assert out.shape == x.shape and out.dtype == x.dtype
    assert jnp.allclose(out, ref, atol=1e-6, rtol=1e-6)

    # Training-mode forward: every element must be either ref/(1-p) (kept) or 0 (dropped).
    p = 0.1
    out_train = positional_encoding(x, pe, dropout_p=p, training=True, seed=123)
    out_train = jax.block_until_ready(out_train)
    assert out_train.shape == x.shape
    scale = 1.0 / (1.0 - p)
    elem_ok = jnp.isclose(out_train, ref * scale, atol=1e-5) | (out_train == 0.0)
    assert bool(jnp.all(elem_ok))

    print("KERNEL_OK")
</pallas_src>

<mosaic_0001>
module attributes {stable_mosaic.version = 11 : i64} {
  func.func @_pe_add_kernel(%arg0: i32, %arg1: memref<8x64xf32, #tpu.memory_space<vmem>>, %arg2: memref<8x64xf32, #tpu.memory_space<vmem>>, %arg3: memref<8x64xf32, #tpu.memory_space<vmem>>) attributes {dimension_semantics = [#tpu.dimension_semantics<parallel>], iteration_bounds = array<i64: 1>, scalar_prefetch = 0 : i64, scratch_operands = 0 : i64, tpu.core_type = #tpu.core_type<tc>, window_params = [{transform_indices = @transform_0, window_bounds = array<i64: 8, 64>}, {transform_indices = @transform_1, window_bounds = array<i64: 8, 64>}, {transform_indices = @transform_2, window_bounds = array<i64: 8, 64>}]} {
    %c0 = arith.constant 0 : index
    %c0_0 = arith.constant 0 : index
    %0 = vector.load %arg1[%c0, %c0_0] : memref<8x64xf32, #tpu.memory_space<vmem>>, vector<8x64xf32>
    %c0_1 = arith.constant 0 : index
    %c0_2 = arith.constant 0 : index
    %1 = vector.load %arg2[%c0_1, %c0_2] : memref<8x64xf32, #tpu.memory_space<vmem>>, vector<8x64xf32>
    %2 = arith.addf %0, %1 : vector<8x64xf32>
    %c0_3 = arith.constant 0 : index
    %c0_4 = arith.constant 0 : index
    %3 = vector.load %arg3[%c0_3, %c0_4] : memref<8x64xf32, #tpu.memory_space<vmem>>, vector<8x64xf32>
    tpu.vector_store %arg3[%c0_3, %c0_4], %2 {strides = array<i32>} : memref<8x64xf32, #tpu.memory_space<vmem>>, vector<8x64xf32>,
    return
  }
  func.func @transform_0(%arg0: i32) -> (i32, i32) {
    %c0_i32 = arith.constant 0 : i32
    %c0_i32_0 = arith.constant 0 : i32
    return %arg0, %c0_i32 : i32, i32
  }
  func.func @transform_1(%arg0: i32) -> (i32, i32) {
    %c0_i32 = arith.constant 0 : i32
    %c0_i32_0 = arith.constant 0 : i32
    return %arg0, %c0_i32 : i32, i32
  }
  func.func @transform_2(%arg0: i32) -> (i32, i32) {
    %c0_i32 = arith.constant 0 : i32
    %c0_i32_0 = arith.constant 0 : i32
    return %arg0, %c0_i32 : i32, i32
  }
}

</mosaic_0001>

<llo_original>
// kernel: tpu_custom_call.1
$region0: #{tpu_custom_call.1}
  #allocation0 [shape = 'u32[]', space=smem, size = 0x4, offset = 0x4, fixed_abs, tag = 'smem constant byte address 0x4 - core index']
  #allocation1 [shape = 'u32[144,128]{1,0:T(1,128)}', space=vmem, size = 0x12000, scoped, tag = 'internal scratch']
  %s0 = inlined_call_operand.hbm [shape: f32[8,64], index: 0, kind: input, shape index: {}]
  %s1 = inlined_call_operand.hbm [shape: f32[8,64], index: 1, kind: input, shape index: {}]
  %s2 = inlined_call_operand.hbm [shape: f32[8,64], index: 2, kind: output, shape index: {}]
  %s3 = sld [smem:[#allocation0]]
  $region26: #{tpu_custom_call.1} parent=0
    _
  %s5 = ssub.s32 1, %s3
  %s6 = scalar_select 0, %s5, %s3
  $region1: #{tpu_custom_call.1} parent=0
    #allocation2 [shape = 'u8[4096]{0}', space=vmem, size = 0x1000, scoped, tag = 'input window, operand 0, single buffered']
    #allocation3 [shape = 's32[1]{0}', space=sflag, size = 0x4, scoped, tag = 'scoped memory for tpu_custom_call.1']
    #allocation4 [shape = 's32[1]{0}', space=sflag, size = 0x4, scoped, tag = 'scoped memory for tpu_custom_call.1']
    #allocation5 [shape = 'u8[4096]{0}', space=vmem, size = 0x1000, scoped, tag = 'input window, operand 1, single buffered']
    #allocation6 [shape = 's32[1]{0}', space=sflag, size = 0x4, scoped, tag = 'scoped memory for tpu_custom_call.1']
    #allocation7 [shape = 'u8[4096]{0}', space=vmem, size = 0x1000, scoped, tag = 'output window, operand 0, single buffered']
    %7 = vsyncpa [#allocation3], 0
    %8 = vsyncpa [#allocation6], 0
    %9 = vsyncpa [#allocation4], 0
    // Predicated region
    $region2: #{tpu_custom_call.1} parent=1 // pred_check
      _
    $region3: #{tpu_custom_call.1} parent=1 // pred_check_branch
      %11 = sbr.rel (0) target = $region5
    $region4: #{tpu_custom_call.1} parent=1 // pred_region
      %s13 = ssub.s32 128, 128
      %14 = vsyncadd [#allocation3], %s13
      %s16 = sshll.u32 [#allocation2], 4
      %s17 = int_to_ptr.vmem [resolvable:$true] %s16
      %19 = dma.hbm_to_vmem [thread:$0]  %s0, 128, %s17, [#allocation3]
    $region5: #{tpu_custom_call.1} parent=1 // pred_fallthru
      _
    // Predicated region
    $region6: #{tpu_custom_call.1} parent=1 // pred_check
      _
    $region7: #{tpu_custom_call.1} parent=1 // pred_check_branch
      %21 = sbr.rel (0) target = $region9
    $region8: #{tpu_custom_call.1} parent=1 // pred_region
      %s23 = ssub.s32 128, 128
      %24 = vsyncadd [#allocation6], %s23
      %s26 = sshll.u32 [#allocation5], 4
      %s27 = int_to_ptr.vmem [resolvable:$true] %s26
      %29 = dma.hbm_to_vmem [thread:$0]  %s1, 128, %s27, [#allocation6]
    $region9: #{tpu_custom_call.1} parent=1 // pred_fallthru
      _
    // Predicated region
    $region10: #{tpu_custom_call.1} parent=1 // pred_check
      _
    $region11: #{tpu_custom_call.1} parent=1 // pred_check_branch
      %31 = sbr.rel (0) target = $region13
    $region12: #{tpu_custom_call.1} parent=1 // pred_region
      %32 = dma.done [#allocation3], 128
    $region13: #{tpu_custom_call.1} parent=1 // pred_fallthru
      _
    // Predicated region
    $region14: #{tpu_custom_call.1} parent=1 // pred_check
      _
    $region15: #{tpu_custom_call.1} parent=1 // pred_check_branch
      %34 = sbr.rel (0) target = $region17
    $region16: #{tpu_custom_call.1} parent=1 // pred_region
      %35 = dma.done [#allocation6], 128
    $region17: #{tpu_custom_call.1} parent=1 // pred_fallthru
      _
    %v36 = vld [vmem:[#allocation2] sm:$0xff]
    %v37 = vld [vmem:[#allocation5] sm:$0xff]
    %v38 = vadd.f32 %v36, %v37
    %vm39 = vcmask 523264
    %40 = vst.msk [vmem:[#allocation7] sm:$0xff] %vm39, %v38
    // Predicated region
    $region18: #{tpu_custom_call.1} parent=1 // pred_check
      _
    $region19: #{tpu_custom_call.1} parent=1 // pred_check_branch
      %42 = sbr.rel (0) target = $region21
    $region20: #{tpu_custom_call.1} parent=1 // pred_region
      %s44 = ssub.s32 128, 128
      %45 = vsyncadd [#allocation4], %s44
      %s47 = sshll.u32 [#allocation7], 4
      %s48 = int_to_ptr.vmem [resolvable:$true] %s47
      %50 = dma.vmem_to_hbm [thread:$0]  %s48, 128, %s2, [#allocation4]
    $region21: #{tpu_custom_call.1} parent=1 // pred_fallthru
      _
    // Predicated region
    $region22: #{tpu_custom_call.1} parent=1 // pred_check
      _
    $region23: #{tpu_custom_call.1} parent=1 // pred_check_branch
      %52 = sbr.rel (0) target = $region25
    $region24: #{tpu_custom_call.1} parent=1 // pred_region
      %53 = dma.done [#allocation4], 128
    $region25: #{tpu_custom_call.1} parent=1 // pred_fallthru
      _
    %54 = vsyncpa [#allocation3], 1
    %55 = vsyncpa [#allocation6], 1
    %56 = vsyncpa [#allocation4], 1

</llo_original>
